<compile_context>
chip_gen: v6e
topology: v6e:2x2x1
jax: 0.10.0
libtpu: 0.0.40
codegen_flags: <defaults>
</compile_context>

<pallas_src>
import functools

import jax
import jax.numpy as jnp
from jax.experimental import pallas as pl
from jax.experimental.pallas import tpu as pltpu

_EPS = 1e-8  # nn.CosineSimilarity default eps


def _cosine_partial_kernel(p_ref, t_ref, o_ref, *, batch, tile_rows, mask_rows):
    # (TB, D) tiles; compute in f32 regardless of input dtype.
    p = p_ref[...].astype(jnp.float32)
    t = t_ref[...].astype(jnp.float32)

    # Per-row reductions over the feature (lane) axis.
    dot = jnp.sum(p * t, axis=1, keepdims=True)   # (TB, 1)
    pp = jnp.sum(p * p, axis=1, keepdims=True)    # (TB, 1)
    tt = jnp.sum(t * t, axis=1, keepdims=True)    # (TB, 1)

    # cos = dot / max(|p|*|t|, eps)  ==  dot * rsqrt(max(|p|^2*|t|^2, eps^2))
    sq = jnp.maximum(pp * tt, jnp.float32(_EPS * _EPS))
    cos = dot * jax.lax.rsqrt(sq)                 # (TB, 1)

    if mask_rows:
        # Last tile may contain padded (undefined) rows when B % TB != 0.
        row = jax.lax.broadcasted_iota(jnp.int32, cos.shape, 0)
        global_row = pl.program_id(0) * tile_rows + row
        cos = jnp.where(global_row < batch, cos, 0.0)

    partial = jnp.sum(cos)                         # scalar partial sum
    # Lane-dense write: broadcast the partial into this tile's (1, 8, 128)
    # output block (unmasked vst); reduced to a scalar outside the kernel.
    o_ref[...] = jnp.full(o_ref.shape, partial, dtype=jnp.float32)


def _choose_tile_rows(B, D):
    """Pick a batch-tile size that fits a conservative VMEM budget."""
    budget = 24 * 1024 * 1024            # headroom under the 32 MiB limit below
    per_row = 2 * 2 * D * 4              # 2 inputs x 2 pipeline buffers x f32
    tb = budget // per_row
    tb = int(min(tb, 1024))              # amortize per-step overhead, cap size
    tb = max((tb // 8) * 8, 8)           # sublane alignment for partial tiles
    if tb >= B:
        return B                         # single full-extent tile
    return tb


def cosine_similarity_loss(predicted, target, tile_rows=None):
    """Pallas TPU implementation of CosineSimilarityLoss.forward."""
    assert predicted.shape == target.shape
    assert predicted.ndim == 2, "layout: (B, D); reduce over dim=1"
    B, D = predicted.shape
    # D stays untiled as the lane axis; if D < 128 lane utilization is D/128
    # (acceptable for small hidden sizes; launch-overhead dominated anyway).

    tb = _choose_tile_rows(B, D) if tile_rows is None else int(tile_rows)
    num_tiles = pl.cdiv(B, tb)
    mask_rows = (B % tb) != 0

    kernel = functools.partial(
        _cosine_partial_kernel, batch=B, tile_rows=tb, mask_rows=mask_rows
    )

    partials = pl.pallas_call(
        kernel,
        out_shape=jax.ShapeDtypeStruct((num_tiles, 8, 128), jnp.float32),
        grid_spec=pltpu.PrefetchScalarGridSpec(
            num_scalar_prefetch=0,
            grid=(num_tiles,),
            in_specs=[
                pl.BlockSpec((tb, D), lambda i: (i, 0)),
                pl.BlockSpec((tb, D), lambda i: (i, 0)),
            ],
            out_specs=pl.BlockSpec((1, 8, 128), lambda i: (i, 0, 0)),
        ),
        compiler_params=pltpu.CompilerParams(
            # Independent per-tile partials -> "parallel" (megacore on v7x).
            dimension_semantics=("parallel",),
            vmem_limit_bytes=32 * 1024 * 1024,
        ),
    )(predicted, target)

    total = jnp.sum(partials[:, 0, 0])
    return 1.0 - total * jnp.float32(1.0 / B)


def _reference(predicted, target):
    p = predicted.astype(jnp.float32)
    t = target.astype(jnp.float32)
    dot = jnp.sum(p * t, axis=1)
    denom = jnp.maximum(
        jnp.linalg.norm(p, axis=1) * jnp.linalg.norm(t, axis=1), _EPS
    )
    return 1.0 - jnp.mean(dot / denom)


if __name__ == "__main__":
    key = jax.random.PRNGKey(0)
    k1, k2, k3, k4 = jax.random.split(key, 4)

    # Small shape consistent with the module: batch=8, hidden=32.
    B, D = 8, 32
    predicted = jax.random.normal(k1, (B, D), dtype=jnp.float32)
    target = jax.random.normal(k2, (B, D), dtype=jnp.float32)

    loss = cosine_similarity_loss(predicted, target)
    loss = jax.block_until_ready(loss)
    ref = _reference(predicted, target)
    assert jnp.allclose(loss, ref, atol=1e-5, rtol=1e-5), (loss, ref)

    # Exercise the tiled + masked path (B not a multiple of the tile size).
    B2, D2 = 40, 32
    p2 = jax.random.normal(k3, (B2, D2), dtype=jnp.float32)
    t2 = jax.random.normal(k4, (B2, D2), dtype=jnp.float32)
    loss2 = jax.block_until_ready(cosine_similarity_loss(p2, t2, tile_rows=16))
    ref2 = _reference(p2, t2)
    assert jnp.allclose(loss2, ref2, atol=1e-5, rtol=1e-5), (loss2, ref2)

    print("KERNEL_OK")
</pallas_src>

<mosaic_0001>
module attributes {stable_mosaic.version = 11 : i64} {
  func.func @_cosine_partial_kernel(%arg0: i32, %arg1: memref<8x32xf32, #tpu.memory_space<vmem>>, %arg2: memref<8x32xf32, #tpu.memory_space<vmem>>, %arg3: memref<1x8x128xf32, #tpu.memory_space<vmem>>) attributes {dimension_semantics = [#tpu.dimension_semantics<parallel>], iteration_bounds = array<i64: 1>, scalar_prefetch = 0 : i64, scratch_operands = 0 : i64, tpu.core_type = #tpu.core_type<tc>, window_params = [{transform_indices = @transform_0, window_bounds = array<i64: 8, 32>}, {transform_indices = @transform_1, window_bounds = array<i64: 8, 32>}, {transform_indices = @transform_2, window_bounds = array<i64: 1, 8, 128>}]} {
    %c0 = arith.constant 0 : index
    %c0_0 = arith.constant 0 : index
    %0 = vector.load %arg1[%c0, %c0_0] : memref<8x32xf32, #tpu.memory_space<vmem>>, vector<8x32xf32>
    %c0_1 = arith.constant 0 : index
    %c0_2 = arith.constant 0 : index
    %1 = vector.load %arg2[%c0_1, %c0_2] : memref<8x32xf32, #tpu.memory_space<vmem>>, vector<8x32xf32>
    %2 = arith.mulf %0, %1 : vector<8x32xf32>
    %cst = arith.constant dense<0.000000e+00> : vector<8xf32>
    %3 = vector.multi_reduction <add>, %2, %cst [1] : vector<8x32xf32> to vector<8xf32>
    %4 = vector.shape_cast %3 : vector<8xf32> to vector<8x1xf32>
    %5 = arith.mulf %0, %0 : vector<8x32xf32>
    %cst_3 = arith.constant dense<0.000000e+00> : vector<8xf32>
    %6 = vector.multi_reduction <add>, %5, %cst_3 [1] : vector<8x32xf32> to vector<8xf32>
    %7 = vector.shape_cast %6 : vector<8xf32> to vector<8x1xf32>
    %8 = arith.mulf %1, %1 : vector<8x32xf32>
    %cst_4 = arith.constant dense<0.000000e+00> : vector<8xf32>
    %9 = vector.multi_reduction <add>, %8, %cst_4 [1] : vector<8x32xf32> to vector<8xf32>
    %10 = vector.shape_cast %9 : vector<8xf32> to vector<8x1xf32>
    %11 = arith.mulf %7, %10 : vector<8x1xf32>
    %cst_5 = arith.constant 1.000000e-16 : f32
    %12 = vector.broadcast %cst_5 : f32 to vector<8x1xf32>
    %13 = arith.maximumf %11, %12 : vector<8x1xf32>
    %14 = math.rsqrt %13 : vector<8x1xf32>
    %15 = arith.mulf %4, %14 : vector<8x1xf32>
    %16 = vector.shape_cast %15 : vector<8x1xf32> to vector<1x8x1xf32>
    %cst_6 = arith.constant dense<0.000000e+00> : vector<1xf32>
    %17 = vector.multi_reduction <add>, %16, %cst_6 [1, 2] : vector<1x8x1xf32> to vector<1xf32>
    %18 = vector.shape_cast %17 : vector<1xf32> to vector<1x1x1xf32>
    %19 = vector.extract %18[0, 0, 0] : f32 from vector<1x1x1xf32>
    %20 = vector.broadcast %19 : f32 to vector<1x8x128xf32>
    %c0_7 = arith.constant 0 : index
    %c0_8 = arith.constant 0 : index
    %c0_9 = arith.constant 0 : index
    %21 = vector.load %arg3[%c0_7, %c0_8, %c0_9] : memref<1x8x128xf32, #tpu.memory_space<vmem>>, vector<1x8x128xf32>
    tpu.vector_store %arg3[%c0_7, %c0_8, %c0_9], %20 {strides = array<i32>} : memref<1x8x128xf32, #tpu.memory_space<vmem>>, vector<1x8x128xf32>,
    return
  }
  func.func @transform_0(%arg0: i32) -> (i32, i32) {
    %c0_i32 = arith.constant 0 : i32
    %c0_i32_0 = arith.constant 0 : i32
    return %arg0, %c0_i32 : i32, i32
  }
  func.func @transform_1(%arg0: i32) -> (i32, i32) {
    %c0_i32 = arith.constant 0 : i32
    %c0_i32_0 = arith.constant 0 : i32
    return %arg0, %c0_i32 : i32, i32
  }
  func.func @transform_2(%arg0: i32) -> (i32, i32, i32) {
    %c0_i32 = arith.constant 0 : i32
    %c0_i32_0 = arith.constant 0 : i32
    %c0_i32_1 = arith.constant 0 : i32
    return %arg0, %c0_i32, %c0_i32_0 : i32, i32, i32
  }
}

</mosaic_0001>

<llo_original>
// kernel: tpu_custom_call.1
$region0: #{tpu_custom_call.1}
  #allocation0 [shape = 'u32[]', space=smem, size = 0x4, offset = 0x4, fixed_abs, tag = 'smem constant byte address 0x4 - core index']
  #allocation1 [shape = 'u32[144,128]{1,0:T(1,128)}', space=vmem, size = 0x12000, scoped, tag = 'internal scratch']
  %s0 = inlined_call_operand.hbm [shape: f32[8,32], index: 0, kind: input, shape index: {}]
  %s1 = inlined_call_operand.hbm [shape: f32[8,32], index: 1, kind: input, shape index: {}]
  %s2 = inlined_call_operand.hbm [shape: f32[1,8,128], index: 2, kind: output, shape index: {}]
  %s3 = sld [smem:[#allocation0]]
  $region26: #{tpu_custom_call.1} parent=0
    _
  %s5 = ssub.s32 1, %s3
  %s6 = scalar_select 0, %s5, %s3
  $region1: #{tpu_custom_call.1} parent=0
    #allocation2 [shape = 'u8[4096]{0}', space=vmem, size = 0x1000, scoped, tag = 'input window, operand 0, single buffered']
    #allocation3 [shape = 's32[1]{0}', space=sflag, size = 0x4, scoped, tag = 'scoped memory for tpu_custom_call.1']
    #allocation4 [shape = 's32[1]{0}', space=sflag, size = 0x4, scoped, tag = 'scoped memory for tpu_custom_call.1']
    #allocation5 [shape = 'u8[4096]{0}', space=vmem, size = 0x1000, scoped, tag = 'input window, operand 1, single buffered']
    #allocation6 [shape = 's32[1]{0}', space=sflag, size = 0x4, scoped, tag = 'scoped memory for tpu_custom_call.1']
    #allocation7 [shape = 'u8[4096]{0}', space=vmem, size = 0x1000, scoped, tag = 'output window, operand 0, single buffered']
    %7 = vsyncpa [#allocation3], 0
    %8 = vsyncpa [#allocation6], 0
    %9 = vsyncpa [#allocation4], 0
    // Predicated region
    $region2: #{tpu_custom_call.1} parent=1 // pred_check
      _
    $region3: #{tpu_custom_call.1} parent=1 // pred_check_branch
      %11 = sbr.rel (0) target = $region5
    $region4: #{tpu_custom_call.1} parent=1 // pred_region
      %s13 = ssub.s32 128, 128
      %14 = vsyncadd [#allocation3], %s13
      %s16 = sshll.u32 [#allocation2], 4
      %s17 = int_to_ptr.vmem [resolvable:$true] %s16
      %19 = dma.hbm_to_vmem [thread:$0]  %s0, 128, %s17, [#allocation3]
    $region5: #{tpu_custom_call.1} parent=1 // pred_fallthru
      _
    // Predicated region
    $region6: #{tpu_custom_call.1} parent=1 // pred_check
      _
    $region7: #{tpu_custom_call.1} parent=1 // pred_check_branch
      %21 = sbr.rel (0) target = $region9
    $region8: #{tpu_custom_call.1} parent=1 // pred_region
      %s23 = ssub.s32 128, 128
      %24 = vsyncadd [#allocation6], %s23
      %s26 = sshll.u32 [#allocation5], 4
      %s27 = int_to_ptr.vmem [resolvable:$true] %s26
      %29 = dma.hbm_to_vmem [thread:$0]  %s1, 128, %s27, [#allocation6]
    $region9: #{tpu_custom_call.1} parent=1 // pred_fallthru
      _
    // Predicated region
    $region10: #{tpu_custom_call.1} parent=1 // pred_check
      _
    $region11: #{tpu_custom_call.1} parent=1 // pred_check_branch
      %31 = sbr.rel (0) target = $region13
    $region12: #{tpu_custom_call.1} parent=1 // pred_region
      %32 = dma.done [#allocation3], 128
    $region13: #{tpu_custom_call.1} parent=1 // pred_fallthru
      _
    // Predicated region
    $region14: #{tpu_custom_call.1} parent=1 // pred_check
      _
    $region15: #{tpu_custom_call.1} parent=1 // pred_check_branch
      %34 = sbr.rel (0) target = $region17
    $region16: #{tpu_custom_call.1} parent=1 // pred_region
      %35 = dma.done [#allocation6], 128
    $region17: #{tpu_custom_call.1} parent=1 // pred_fallthru
      _
    %v36 = vld [vmem:[#allocation2] sm:$0xff]
    %v37 = vld [vmem:[#allocation5] sm:$0xff]
    %v38 = vmul.f32 %v36, %v37
    %vm39 = vcmask 261120
    %v40 = vsel %vm39, %v38, 0.0
    %41 = vadd.xlane.f32.xlu0 %v40
    %v42 = vpop.xlane.xlu0 %41
    %v43 = vmul.f32 %v36, %v36
    %v44 = vsel %vm39, %v43, 0.0
    %45 = vadd.xlane.f32.xlu0 %v44
    %v46 = vpop.xlane.xlu0 %45
    %v47 = vmul.f32 %v37, %v37
    %v48 = vsel %vm39, %v47, 0.0
    %49 = vadd.xlane.f32.xlu0 %v48
    %v50 = vpop.xlane.xlu0 %49
    %v51 = vmul.f32 %v46, %v50
    %v52 = vmax.f32 %v51, 1e-16
    %v53 = vrsqrt.pop %v52
    %v54 = vmul.f32 %v42, %v53
    %vm55 = vcmask 7168
    %v56 = vsel %vm55, %v54, 0.0
    %57 = vadd.xlane.f32.xlu0 %v56
    %v58 = vpop.xlane.xlu0 %57
    %v59 = vrot.slane %v58, 4
    %v60 = vadd.f32 %v58, %v59
    %v61 = vrot.slane %v60, 2
    %v62 = vadd.f32 %v60, %v61
    %v63 = vrot.slane %v62, 1
    %v64 = vadd.f32 %v62, %v63
    %s65 = vtos %v64
    %v66 = vstv %s65
    %67 = vst [vmem:[#allocation7] sm:$0xff] %v66
    // Predicated region
    $region18: #{tpu_custom_call.1} parent=1 // pred_check
      _
    $region19: #{tpu_custom_call.1} parent=1 // pred_check_branch
      %69 = sbr.rel (0) target = $region21
    $region20: #{tpu_custom_call.1} parent=1 // pred_region
      %s71 = ssub.s32 128, 128
      %72 = vsyncadd [#allocation4], %s71
      %s74 = sshll.u32 [#allocation7], 4
      %s75 = int_to_ptr.vmem [resolvable:$true] %s74
      %77 = dma.vmem_to_hbm [thread:$0]  %s75, 128, %s2, [#allocation4]
    $region21: #{tpu_custom_call.1} parent=1 // pred_fallthru
      _
    // Predicated region
    $region22: #{tpu_custom_call.1} parent=1 // pred_check
      _
    $region23: #{tpu_custom_call.1} parent=1 // pred_check_branch
      %79 = sbr.rel (0) target = $region25
    $region24: #{tpu_custom_call.1} parent=1 // pred_region
      %80 = dma.done [#allocation4], 128
    $region25: #{tpu_custom_call.1} parent=1 // pred_fallthru
      _
    %81 = vsyncpa [#allocation3], 1
    %82 = vsyncpa [#allocation6], 1
    %83 = vsyncpa [#allocation4], 1

</llo_original>
